<compile_context>
chip_gen: v5e
topology: v5e:2x2
jax: 0.10.0
libtpu: 0.0.40
codegen_flags: <defaults>
</compile_context>

<pallas_src>
import jax
import jax.numpy as jnp
from jax.experimental import pallas as pl
from jax.experimental.pallas import tpu as pltpu

LN_EPS = 1e-5                    # PyTorch nn.LayerNorm default
_SQRT_HALF = 0.7071067811865476
TILE_ROWS = 2048                 # default row tile (multiple of 8); ~0.75 MiB/step of I/O buffers


def _normalize(x):
    """LayerNorm without the affine part (gamma/beta are folded into the next Linear)."""
    mu = jnp.mean(x, axis=-1, keepdims=True)
    var = jnp.mean(jnp.square(x - mu), axis=-1, keepdims=True)
    return (x - mu) * jax.lax.rsqrt(var + LN_EPS)


def _layernorm(x, gamma, beta):
    return _normalize(x) * gamma + beta


def adapt_kernel(x_ref,
                 w0_ref, b0_ref,
                 w1_ref, b1_ref,
                 w2_ref, b2_ref,
                 o_ref):
    # Compute in f32 regardless of the streaming dtype (no bf16 VPU on v5e).
    h = _normalize(x_ref[...].astype(jnp.float32))                               # 'n' (affine folded)
    h = jnp.dot(h, w0_ref[...], preferred_element_type=jnp.float32) + b0_ref[...]  # 'l' 32->16
    h = h * jax.nn.sigmoid(h)                                                     # 's' SiLU
    h = _normalize(h)                                                             # 'n' (affine folded)
    h = jnp.dot(h, w1_ref[...], preferred_element_type=jnp.float32) + b1_ref[...]  # 'l' 16->8
    h = 0.5 * h * (1.0 + jax.lax.erf(h * jnp.float32(_SQRT_HALF)))                # 'g' exact GELU
    h = jnp.dot(h, w2_ref[...], preferred_element_type=jnp.float32) + b2_ref[...]  # 'l' 8->16
    # 'd' Dropout — identity in eval mode.
    # TODO(synk): training-mode dropout (pltpu.prng_seed / prng_random_bits) not wired up.
    o_ref[...] = h.astype(o_ref.dtype)


def _fold_layernorm_affine(params):
    """Fold LN gamma/beta into the following Linear: (x̂*g + b) @ W + c == x̂ @ (diag(g)W) + (b@W + c)."""
    w0 = params["ln0_g"].reshape(-1, 1) * params["w0"]
    b0 = params["ln0_b"] @ params["w0"] + params["b0"]
    w1 = params["ln1_g"].reshape(-1, 1) * params["w1"]
    b1 = params["ln1_b"] @ params["w1"] + params["b1"]
    return w0, b0, w1, b1


def adapt_forward(x, params, *, tile_rows=TILE_ROWS):
    batch, seq, in_size = x.shape
    out_size = params["w2"].shape[1]
    rows = batch * seq
    x2 = x.reshape(rows, in_size)

    w0, b0, w1, b1 = _fold_layernorm_affine(params)
    w2, b2 = params["w2"], params["b2"]

    # Row tiling: tile must be a multiple of 8; pad rows up to a tile multiple.
    padded8 = ((rows + 7) // 8) * 8
    tile_rows = min(int(tile_rows), padded8)
    tile_rows = ((tile_rows + 7) // 8) * 8
    padded_rows = pl.cdiv(rows, tile_rows) * tile_rows
    if padded_rows != rows:
        x2 = jnp.pad(x2, ((0, padded_rows - rows), (0, 0)))
    grid = (padded_rows // tile_rows,)

    def row_spec(width):
        return pl.BlockSpec((tile_rows, width), lambda i: (i, 0))

    def const_spec(arr):  # VMEM-resident across the whole grid
        return pl.BlockSpec(arr.shape, lambda i: (0, 0))

    h0, h1 = w0.shape[1], w1.shape[1]
    flops_per_row = 2 * (in_size * h0 + h0 * h1 + h1 * out_size) + 8 * (in_size + h0)
    cost = pl.CostEstimate(
        flops=int(padded_rows * flops_per_row),
        transcendentals=int(padded_rows * (h0 + h1 + 2)),
        bytes_accessed=int(padded_rows * (in_size * x2.dtype.itemsize
                                          + out_size * jnp.dtype(x.dtype).itemsize)),
    )

    out = pl.pallas_call(
        adapt_kernel,
        out_shape=jax.ShapeDtypeStruct((padded_rows, out_size), x.dtype),
        grid=grid,
        in_specs=[
            row_spec(in_size),
            const_spec(w0), const_spec(b0),
            const_spec(w1), const_spec(b1),
            const_spec(w2), const_spec(b2),
        ],
        out_specs=row_spec(out_size),
        compiler_params=pltpu.CompilerParams(
            dimension_semantics=("parallel",)),   # megacore sharding on v7x
        cost_estimate=cost,
    )(x2, w0, b0, w1, b1, w2, b2)

    if padded_rows != rows:
        out = out[:rows]
    return out.reshape(batch, seq, out_size)


def init_params(key, in_size, out_size, depth=3):
    # size_list exactly as in Adapt.__init__
    size_list = [in_size]
    for _ in range(1, depth):
        size_list.append(size_list[-1] // 2)
    size_list.append(out_size)

    ks = jax.random.split(key, 10)

    # NOTE: PyTorch Linear stores weight as (out, in); we store (in, out) so the
    # kernel computes h @ W directly (equivalent to h @ weight.T in torch).
    def lin(kw, kb, din, dout):
        bound = 1.0 / jnp.sqrt(din)
        w = jax.random.uniform(kw, (din, dout), jnp.float32, -bound, bound)
        b = jax.random.uniform(kb, (1, dout), jnp.float32, -bound, bound)
        return w, b

    w0, b0 = lin(ks[0], ks[1], size_list[0], size_list[1])
    w1, b1 = lin(ks[2], ks[3], size_list[1], size_list[2])
    w2, b2 = lin(ks[4], ks[5], size_list[2], size_list[3])

    # LayerNorm params (nontrivial but deterministic)
    ln0_g = 1.0 + 0.05 * jax.random.normal(ks[6], (1, size_list[0]), jnp.float32)
    ln0_b = 0.05 * jax.random.normal(ks[7], (1, size_list[0]), jnp.float32)
    ln1_g = 1.0 + 0.05 * jax.random.normal(ks[8], (1, size_list[1]), jnp.float32)
    ln1_b = 0.05 * jax.random.normal(ks[9], (1, size_list[1]), jnp.float32)

    return dict(w0=w0, b0=b0, w1=w1, b1=b1, w2=w2, b2=b2,
                ln0_g=ln0_g, ln0_b=ln0_b, ln1_g=ln1_g, ln1_b=ln1_b)


def adapt_reference(x, params):
    """Pure-JAX reference of the same forward (unfolded, mirrors the PyTorch module)."""
    rows = x.shape[0] * x.shape[1]
    h = x.reshape(rows, x.shape[2]).astype(jnp.float32)
    h = _layernorm(h, params["ln0_g"], params["ln0_b"])
    h = h @ params["w0"] + params["b0"]
    h = h * jax.nn.sigmoid(h)
    h = _layernorm(h, params["ln1_g"], params["ln1_b"])
    h = h @ params["w1"] + params["b1"]
    h = 0.5 * h * (1.0 + jax.lax.erf(h * _SQRT_HALF))
    h = h @ params["w2"] + params["b2"]
    return h.reshape(x.shape[0], x.shape[1], -1)


if __name__ == "__main__":
    key = jax.random.PRNGKey(0)
    k_x, k_p = jax.random.split(key)

    batch, seq, in_size, out_size = 2, 8, 32, 16
    params = init_params(k_p, in_size, out_size, depth=3)

    # Small f32 path (single tile).
    x = jax.random.normal(k_x, (batch, seq, in_size), jnp.float32)
    out = jax.block_until_ready(adapt_forward(x, params))
    ref = adapt_reference(x, params)
    assert out.shape == (batch, seq, out_size)
    assert jnp.allclose(out, ref, atol=1e-4, rtol=1e-4), "mismatch vs reference (f32, small)"

    # Larger, non-tile-multiple row count: exercises the pipelined multi-step grid + tail padding.
    xb = jax.random.normal(k_x, (4, 1000, in_size), jnp.float32)
    outb = jax.block_until_ready(adapt_forward(xb, params, tile_rows=1024))
    refb = adapt_reference(xb, params)
    assert jnp.allclose(outb, refb, atol=1e-4, rtol=1e-4), "mismatch vs reference (f32, tiled)"

    # bf16 I/O path (halves HBM traffic; compute stays f32 inside the kernel).
    out_bf16 = jax.block_until_ready(adapt_forward(xb.astype(jnp.bfloat16), params))
    assert out_bf16.dtype == jnp.bfloat16
    assert jnp.allclose(out_bf16.astype(jnp.float32), refb, atol=1e-1, rtol=1e-1), \
        "mismatch vs reference (bf16 I/O)"

    print("KERNEL_OK")
</pallas_src>

<mosaic_0001>
module attributes {stable_mosaic.version = 11 : i64} {
  func.func @adapt_kernel(%arg0: i32, %arg1: memref<16x32xf32, #tpu.memory_space<vmem>>, %arg2: memref<32x16xf32, #tpu.memory_space<vmem>>, %arg3: memref<1x16xf32, #tpu.memory_space<vmem>>, %arg4: memref<16x8xf32, #tpu.memory_space<vmem>>, %arg5: memref<1x8xf32, #tpu.memory_space<vmem>>, %arg6: memref<8x16xf32, #tpu.memory_space<vmem>>, %arg7: memref<1x16xf32, #tpu.memory_space<vmem>>, %arg8: memref<16x16xf32, #tpu.memory_space<vmem>>) attributes {dimension_semantics = [#tpu.dimension_semantics<parallel>], iteration_bounds = array<i64: 1>, scalar_prefetch = 0 : i64, scratch_operands = 0 : i64, tpu.core_type = #tpu.core_type<tc>, window_params = [{transform_indices = @transform_0, window_bounds = array<i64: 16, 32>}, {pipeline_mode = #tpu.pipeline_mode<synchronous>, transform_indices = @transform_1, window_bounds = array<i64: 32, 16>}, {pipeline_mode = #tpu.pipeline_mode<synchronous>, transform_indices = @transform_2, window_bounds = array<i64: 1, 16>}, {pipeline_mode = #tpu.pipeline_mode<synchronous>, transform_indices = @transform_3, window_bounds = array<i64: 16, 8>}, {pipeline_mode = #tpu.pipeline_mode<synchronous>, transform_indices = @transform_4, window_bounds = array<i64: 1, 8>}, {pipeline_mode = #tpu.pipeline_mode<synchronous>, transform_indices = @transform_5, window_bounds = array<i64: 8, 16>}, {pipeline_mode = #tpu.pipeline_mode<synchronous>, transform_indices = @transform_6, window_bounds = array<i64: 1, 16>}, {transform_indices = @transform_7, window_bounds = array<i64: 16, 16>}]} {
    %c0 = arith.constant 0 : index
    %c0_0 = arith.constant 0 : index
    %0 = vector.load %arg1[%c0, %c0_0] : memref<16x32xf32, #tpu.memory_space<vmem>>, vector<16x32xf32>
    %cst = arith.constant dense<0.000000e+00> : vector<16xf32>
    %1 = vector.multi_reduction <add>, %0, %cst [1] : vector<16x32xf32> to vector<16xf32>
    %2 = vector.shape_cast %1 : vector<16xf32> to vector<16x1xf32>
    %cst_1 = arith.constant 3.200000e+01 : f32
    %3 = vector.broadcast %cst_1 : f32 to vector<16x1xf32>
    %4 = arith.divf %2, %3 : vector<16x1xf32>
    %5 = vector.broadcast %4 : vector<16x1xf32> to vector<16x32xf32>
    %6 = arith.subf %0, %5 : vector<16x32xf32>
    %7 = arith.mulf %6, %6 : vector<16x32xf32>
    %cst_2 = arith.constant dense<0.000000e+00> : vector<16xf32>
    %8 = vector.multi_reduction <add>, %7, %cst_2 [1] : vector<16x32xf32> to vector<16xf32>
    %9 = vector.shape_cast %8 : vector<16xf32> to vector<16x1xf32>
    %cst_3 = arith.constant 3.200000e+01 : f32
    %10 = vector.broadcast %cst_3 : f32 to vector<16x1xf32>
    %11 = arith.divf %9, %10 : vector<16x1xf32>
    %12 = vector.broadcast %4 : vector<16x1xf32> to vector<16x32xf32>
    %13 = arith.subf %0, %12 : vector<16x32xf32>
    %cst_4 = arith.constant 9.99999974E-6 : f32
    %14 = vector.broadcast %cst_4 : f32 to vector<16x1xf32>
    %15 = arith.addf %11, %14 : vector<16x1xf32>
    %16 = math.rsqrt %15 : vector<16x1xf32>
    %17 = vector.broadcast %16 : vector<16x1xf32> to vector<16x32xf32>
    %18 = arith.mulf %13, %17 : vector<16x32xf32>
    %c0_5 = arith.constant 0 : index
    %c0_6 = arith.constant 0 : index
    %19 = vector.load %arg2[%c0_5, %c0_6] : memref<32x16xf32, #tpu.memory_space<vmem>>, vector<32x16xf32>
    %cst_7 = arith.constant dense<0.000000e+00> : vector<16x16xf32>
    %20 = tpu.matmul %18, %19, %cst_7 {dimension_numbers = #tpu.dot_dimension_numbers<[1], [0], [0], [1], [0, 0, 1, 1], [], []>} : vector<16x32xf32>, vector<32x16xf32>, vector<16x16xf32> -> vector<16x16xf32>
    %c0_8 = arith.constant 0 : index
    %c0_9 = arith.constant 0 : index
    %21 = vector.load %arg3[%c0_8, %c0_9] : memref<1x16xf32, #tpu.memory_space<vmem>>, vector<1x16xf32>
    %22 = vector.broadcast %21 : vector<1x16xf32> to vector<16x16xf32>
    %23 = arith.addf %20, %22 : vector<16x16xf32>
    %24 = arith.negf %23 : vector<16x16xf32>
    %25 = math.exp %24 : vector<16x16xf32>
    %cst_10 = arith.constant 1.000000e+00 : f32
    %26 = vector.broadcast %cst_10 : f32 to vector<16x16xf32>
    %27 = arith.addf %26, %25 : vector<16x16xf32>
    %28 = arith.divf %26, %27 : vector<16x16xf32>
    %29 = arith.mulf %23, %28 : vector<16x16xf32>
    %cst_11 = arith.constant dense<0.000000e+00> : vector<16xf32>
    %30 = vector.multi_reduction <add>, %29, %cst_11 [1] : vector<16x16xf32> to vector<16xf32>
    %31 = vector.shape_cast %30 : vector<16xf32> to vector<16x1xf32>
    %cst_12 = arith.constant 1.600000e+01 : f32
    %32 = vector.broadcast %cst_12 : f32 to vector<16x1xf32>
    %33 = arith.divf %31, %32 : vector<16x1xf32>
    %34 = vector.broadcast %33 : vector<16x1xf32> to vector<16x16xf32>
    %35 = arith.subf %29, %34 : vector<16x16xf32>
    %36 = arith.mulf %35, %35 : vector<16x16xf32>
    %cst_13 = arith.constant dense<0.000000e+00> : vector<16xf32>
    %37 = vector.multi_reduction <add>, %36, %cst_13 [1] : vector<16x16xf32> to vector<16xf32>
    %38 = vector.shape_cast %37 : vector<16xf32> to vector<16x1xf32>
    %cst_14 = arith.constant 1.600000e+01 : f32
    %39 = vector.broadcast %cst_14 : f32 to vector<16x1xf32>
    %40 = arith.divf %38, %39 : vector<16x1xf32>
    %41 = vector.broadcast %33 : vector<16x1xf32> to vector<16x16xf32>
    %42 = arith.subf %29, %41 : vector<16x16xf32>
    %cst_15 = arith.constant 9.99999974E-6 : f32
    %43 = vector.broadcast %cst_15 : f32 to vector<16x1xf32>
    %44 = arith.addf %40, %43 : vector<16x1xf32>
    %45 = math.rsqrt %44 : vector<16x1xf32>
    %46 = vector.broadcast %45 : vector<16x1xf32> to vector<16x16xf32>
    %47 = arith.mulf %42, %46 : vector<16x16xf32>
    %c0_16 = arith.constant 0 : index
    %c0_17 = arith.constant 0 : index
    %48 = vector.load %arg4[%c0_16, %c0_17] : memref<16x8xf32, #tpu.memory_space<vmem>>, vector<16x8xf32>
    %cst_18 = arith.constant dense<0.000000e+00> : vector<16x8xf32>
    %49 = tpu.matmul %47, %48, %cst_18 {dimension_numbers = #tpu.dot_dimension_numbers<[1], [0], [0], [1], [0, 0, 1, 1], [], []>} : vector<16x16xf32>, vector<16x8xf32>, vector<16x8xf32> -> vector<16x8xf32>
    %c0_19 = arith.constant 0 : index
    %c0_20 = arith.constant 0 : index
    %50 = vector.load %arg5[%c0_19, %c0_20] : memref<1x8xf32, #tpu.memory_space<vmem>>, vector<1x8xf32>
    %51 = vector.broadcast %50 : vector<1x8xf32> to vector<16x8xf32>
    %52 = arith.addf %49, %51 : vector<16x8xf32>
    %cst_21 = arith.constant 5.000000e-01 : f32
    %53 = vector.broadcast %cst_21 : f32 to vector<16x8xf32>
    %54 = arith.mulf %53, %52 : vector<16x8xf32>
    %cst_22 = arith.constant 0.707106769 : f32
    %55 = vector.broadcast %cst_22 : f32 to vector<16x8xf32>
    %56 = arith.mulf %52, %55 : vector<16x8xf32>
    %57 = math.erf %56 : vector<16x8xf32>
    %cst_23 = arith.constant 1.000000e+00 : f32
    %58 = vector.broadcast %cst_23 : f32 to vector<16x8xf32>
    %59 = arith.addf %58, %57 : vector<16x8xf32>
    %60 = arith.mulf %54, %59 : vector<16x8xf32>
    %c0_24 = arith.constant 0 : index
    %c0_25 = arith.constant 0 : index
    %61 = vector.load %arg6[%c0_24, %c0_25] : memref<8x16xf32, #tpu.memory_space<vmem>>, vector<8x16xf32>
    %cst_26 = arith.constant dense<0.000000e+00> : vector<16x16xf32>
    %62 = tpu.matmul %60, %61, %cst_26 {dimension_numbers = #tpu.dot_dimension_numbers<[1], [0], [0], [1], [0, 0, 1, 1], [], []>} : vector<16x8xf32>, vector<8x16xf32>, vector<16x16xf32> -> vector<16x16xf32>
    %c0_27 = arith.constant 0 : index
    %c0_28 = arith.constant 0 : index
    %63 = vector.load %arg7[%c0_27, %c0_28] : memref<1x16xf32, #tpu.memory_space<vmem>>, vector<1x16xf32>
    %64 = vector.broadcast %63 : vector<1x16xf32> to vector<16x16xf32>
    %65 = arith.addf %62, %64 : vector<16x16xf32>
    %c0_29 = arith.constant 0 : index
    %c0_30 = arith.constant 0 : index
    %66 = vector.load %arg8[%c0_29, %c0_30] : memref<16x16xf32, #tpu.memory_space<vmem>>, vector<16x16xf32>
    tpu.vector_store %arg8[%c0_29, %c0_30], %65 {strides = array<i32>} : memref<16x16xf32, #tpu.memory_space<vmem>>, vector<16x16xf32>,
    return
  }
  func.func @transform_0(%arg0: i32) -> (i32, i32) {
    %c0_i32 = arith.constant 0 : i32
    %c0_i32_0 = arith.constant 0 : i32
    return %arg0, %c0_i32 : i32, i32
  }
  func.func @transform_1(%arg0: i32) -> (i32, i32) {
    %c0_i32 = arith.constant 0 : i32
    %c0_i32_0 = arith.constant 0 : i32
    %c0_i32_1 = arith.constant 0 : i32
    return %c0_i32, %c0_i32_0 : i32, i32
  }
  func.func @transform_2(%arg0: i32) -> (i32, i32) {
    %c0_i32 = arith.constant 0 : i32
    %c0_i32_0 = arith.constant 0 : i32
    %c0_i32_1 = arith.constant 0 : i32
    return %c0_i32, %c0_i32_0 : i32, i32
  }
  func.func @transform_3(%arg0: i32) -> (i32, i32) {
    %c0_i32 = arith.constant 0 : i32
    %c0_i32_0 = arith.constant 0 : i32
    %c0_i32_1 = arith.constant 0 : i32
    return %c0_i32, %c0_i32_0 : i32, i32
  }
  func.func @transform_4(%arg0: i32) -> (i32, i32) {
    %c0_i32 = arith.constant 0 : i32
    %c0_i32_0 = arith.constant 0 : i32
    %c0_i32_1 = arith.constant 0 : i32
    return %c0_i32, %c0_i32_0 : i32, i32
  }
  func.func @transform_5(%arg0: i32) -> (i32, i32) {
    %c0_i32 = arith.constant 0 : i32
    %c0_i32_0 = arith.constant 0 : i32
    %c0_i32_1 = arith.constant 0 : i32
    return %c0_i32, %c0_i32_0 : i32, i32
  }
  func.func @transform_6(%arg0: i32) -> (i32, i32) {
    %c0_i32 = arith.constant 0 : i32
    %c0_i32_0 = arith.constant 0 : i32
    %c0_i32_1 = arith.constant 0 : i32
    return %c0_i32, %c0_i32_0 : i32, i32
  }
  func.func @transform_7(%arg0: i32) -> (i32, i32) {
    %c0_i32 = arith.constant 0 : i32
    %c0_i32_0 = arith.constant 0 : i32
    return %arg0, %c0_i32 : i32, i32
  }
}

</mosaic_0001>

<llo_original>
// kernel: tpu_custom_call.1
$region0: #{tpu_custom_call.1}
  #allocation0 [shape = 'u32[]', space=smem, size = 0x4, offset = 0x4, fixed_abs, tag = 'smem constant byte address 0x4 - core index']
  #allocation1 [shape = 'u32[72,128]{1,0:T(1,128)}', space=vmem, size = 0x9000, scoped, tag = 'internal scratch']
  %s0 = inlined_call_operand.vmem [shape: f32[16,32], index: 0, kind: input, shape index: {}]
  %s1 = inlined_call_operand.vmem [shape: f32[32,16], index: 1, kind: input, shape index: {}]
  %s2 = inlined_call_operand.vmem [shape: f32[1,16], index: 2, kind: input, shape index: {}]
  %s3 = inlined_call_operand.vmem [shape: f32[16,8], index: 3, kind: input, shape index: {}]
  %s4 = inlined_call_operand.vmem [shape: f32[1,8], index: 4, kind: input, shape index: {}]
  %s5 = inlined_call_operand.vmem [shape: f32[8,16], index: 5, kind: input, shape index: {}]
  %s6 = inlined_call_operand.vmem [shape: f32[1,16], index: 6, kind: input, shape index: {}]
  %s7 = inlined_call_operand.hbm [shape: f32[16,16], index: 7, kind: output, shape index: {}]
  %s8 = sld [smem:[#allocation0]]
  $region38: #{tpu_custom_call.1} parent=0
    _
  %s10 = ssub.s32 1, %s8
  %s11 = scalar_select 0, %s10, %s8
  $region1: #{tpu_custom_call.1} parent=0
    #allocation2 [shape = 'u8[8192]{0}', space=vmem, size = 0x2000, scoped, tag = 'output window, operand 0, single buffered']
    #allocation3 [shape = 's32[1]{0}', space=sflag, size = 0x4, scoped, tag = 'scoped memory for tpu_custom_call.1']
    %12 = vsyncpa [#allocation3], 0
    // Predicated region
    $region2: #{tpu_custom_call.1} parent=1 // pred_check
      _
    $region3: #{tpu_custom_call.1} parent=1 // pred_check_branch
      %14 = sbr.rel (0) target = $region5
    $region4: #{tpu_custom_call.1} parent=1 // pred_region
      _
    $region5: #{tpu_custom_call.1} parent=1 // pred_fallthru
      _
    // Predicated region
    $region6: #{tpu_custom_call.1} parent=1 // pred_check
      _
    $region7: #{tpu_custom_call.1} parent=1 // pred_check_branch
      %16 = sbr.rel (0) target = $region9
    $region8: #{tpu_custom_call.1} parent=1 // pred_region
      _
    $region9: #{tpu_custom_call.1} parent=1 // pred_fallthru
      _
    // Predicated region
    $region10: #{tpu_custom_call.1} parent=1 // pred_check
      _
    $region11: #{tpu_custom_call.1} parent=1 // pred_check_branch
      %18 = sbr.rel (0) target = $region13
    $region12: #{tpu_custom_call.1} parent=1 // pred_region
      _
    $region13: #{tpu_custom_call.1} parent=1 // pred_fallthru
      _
    // Predicated region
    $region14: #{tpu_custom_call.1} parent=1 // pred_check
      _
    $region15: #{tpu_custom_call.1} parent=1 // pred_check_branch
      %20 = sbr.rel (0) target = $region17
    $region16: #{tpu_custom_call.1} parent=1 // pred_region
      _
    $region17: #{tpu_custom_call.1} parent=1 // pred_fallthru
      _
    // Predicated region
    $region18: #{tpu_custom_call.1} parent=1 // pred_check
      _
    $region19: #{tpu_custom_call.1} parent=1 // pred_check_branch
      %22 = sbr.rel (0) target = $region21
    $region20: #{tpu_custom_call.1} parent=1 // pred_region
      _
    $region21: #{tpu_custom_call.1} parent=1 // pred_fallthru
      _
    // Predicated region
    $region22: #{tpu_custom_call.1} parent=1 // pred_check
      _
    $region23: #{tpu_custom_call.1} parent=1 // pred_check_branch
      %24 = sbr.rel (0) target = $region25
    $region24: #{tpu_custom_call.1} parent=1 // pred_region
      _
    $region25: #{tpu_custom_call.1} parent=1 // pred_fallthru
      _
    // Predicated region
    $region26: #{tpu_custom_call.1} parent=1 // pred_check
      _
    $region27: #{tpu_custom_call.1} parent=1 // pred_check_branch
      %26 = sbr.rel (0) target = $region29
    $region28: #{tpu_custom_call.1} parent=1 // pred_region
      _
    $region29: #{tpu_custom_call.1} parent=1 // pred_fallthru
      _
    %v27 = vld [vmem:[%s0] sm:$0xff]
    %v28 = vld [vmem:[%s0 + $0x8] sm:$0xff]
    %vm29 = vcmask 261120
    %v30 = vsel %vm29, %v27, 0.0
    %31 = vadd.xlane.f32.xlu0 %v30
    %v32 = vpop.xlane.xlu0 %31
    %v33 = vsel %vm29, %v28, 0.0
    %34 = vadd.xlane.f32.xlu0 %v33
    %v35 = vpop.xlane.xlu0 %34
    %v36 = vrcp.pop 32.0
    %v37 = vmul.f32 32.0, %v36
    %v38 = vsub.f32 1.0, %v37
    %v39 = vmul.f32 %v36, %v38
    %v40 = vadd.f32 %v36, %v39
    %vm41 = vweird.f32 %v36
    %v42 = vsel %vm41, %v36, %v40
    %v43 = vmul.f32 %v32, %v42
    %v44 = vmul.f32 %v35, %v42
    %v45 = vsub.f32 %v27, %v43
    %v46 = vsub.f32 %v28, %v44
    %v47 = vmul.f32 %v45, %v45
    %v48 = vmul.f32 %v46, %v46
    %v49 = vsel %vm29, %v47, 0.0
    %50 = vadd.xlane.f32.xlu0 %v49
    %v51 = vpop.xlane.xlu0 %50
    %v52 = vsel %vm29, %v48, 0.0
    %53 = vadd.xlane.f32.xlu0 %v52
    %v54 = vpop.xlane.xlu0 %53
    %v55 = vmul.f32 %v51, %v42
    %v56 = vmul.f32 %v54, %v42
    %v57 = vadd.f32 %v55, 1e-05
    %v58 = vadd.f32 %v56, 1e-05
    %v59 = vrsqrt.pop %v57
    %v60 = vmul.f32 %v59, %v57
    %v61 = vmul.f32 %v60, %v59
    %v62 = vmul.f32 0.5, %v61
    %v63 = vsub.f32 1.5, %v62
    %v64 = vmul.f32 %v59, %v63
    %vm65 = vweird.f32 %v57
    %vm66 = vweird.f32 %v59
    %vm67 = vmor %vm65, %vm66
    %v68 = vsel %vm67, %v59, %v64
    %v69 = vrsqrt.pop %v58
    %v70 = vmul.f32 %v69, %v58
    %v71 = vmul.f32 %v70, %v69
    %v72 = vmul.f32 0.5, %v71
    %v73 = vsub.f32 1.5, %v72
    %v74 = vmul.f32 %v69, %v73
    %vm75 = vweird.f32 %v58
    %vm76 = vweird.f32 %v69
    %vm77 = vmor %vm75, %vm76
    %v78 = vsel %vm77, %v69, %v74
    %v79 = vmul.f32 %v45, %v68
    %v80 = vmul.f32 %v46, %v78
    %v81 = vld [vmem:[%s1] sm:$0xff]
    %v82 = vld [vmem:[%s1 + $0x8] sm:$0xff]
    %v83 = vld [vmem:[%s1 + $0x10] sm:$0xff]
    %v84 = vld [vmem:[%s1 + $0x18] sm:$0xff]
    %v85 = vld [vmem:[%s2] sm:$0x1]
    %v87 = vperm.slane %v85, 0
    %v90 = vsel %vm29, %v79, 0
    %v93 = vsel %vm29, %v80, 0
    %95 = vmatpush.msra.mxu0 0.0
    %96 = vmatpush.msra.mxu0 0.0
    %97 = vmatpush.msra.mxu0 0.0
    %98 = vmatpush.msra.mxu0 0.0
    %99 = vmatpush.msra.mxu0 0.0
    %100 = vmatpush.msra.mxu0 0.0
    %101 = vmatpush.msra.mxu0 0.0
    %102 = vmatpush.msra.mxu0 0.0
    %103 = vmatpush.msra.mxu0 0.0
    %104 = vmatpush.msra.mxu0 0.0
    %105 = vmatpush.msra.mxu0 0.0
    %106 = vmatpush.msra.mxu0 0.0
    %107 = vmatpush.msra.mxu0 %v84
    %108 = vmatpush.msra.mxu0 %v83
    %109 = vmatpush.msra.mxu0 %v82
    %110 = vmatpush.msra.mxu0 %v81
    %111 = vmatmul.f32.gmra.mxu0 %v90
    %v112 = vpop.f32.mrf.mxu0
    %v113 = vadd.f32 %v87, %v112
    %114 = vmatmul.f32.gmra.mxu0 %v93
    %v115 = vpop.f32.mrf.mxu0
    %v116 = vadd.f32 %v87, %v115
    %117 = vdwg.mxu0
    %v118 = vxor.u32 %v113, 2147483648
    %v119 = vxor.u32 %v116, 2147483648
    %v120 = vmul.f32 %v118, 1.442695
    %v121 = vpow.pop %v120
    %v122 = vmul.f32 %v119, 1.442695
    %v123 = vpow.pop %v122
    %v124 = vadd.f32 %v121, 1.0
    %v125 = vadd.f32 %v123, 1.0
    %v126 = vrcp.pop %v124
    %v127 = vmul.f32 %v124, %v126
    %v128 = vsub.f32 1.0, %v127
    %v129 = vmul.f32 %v126, %v128
    %v130 = vadd.f32 %v126, %v129
    %vm131 = vweird.f32 %v124
    %vm132 = vweird.f32 %v126
    %vm133 = vmor %vm131, %vm132
    %v134 = vsel %vm133, %v126, %v130
    %v135 = vand.u32 2147483647, %v124
    %vm136 = vcmp.eq.f32.partialorder %v135, 8.507059e+37
    %v137 = vand.u32 %v124, 2147483648
    %v138 = vor.u32 1.1754944e-38, %v137
    %v139 = vsel %vm136, %v138, %v134
    %v140 = vmul.f32 1.0, %v139
    %v141 = vrcp.pop %v125
    %v142 = vmul.f32 %v125, %v141
    %v143 = vsub.f32 1.0, %v142
    %v144 = vmul.f32 %v141, %v143
    %v145 = vadd.f32 %v141, %v144
    %vm146 = vweird.f32 %v125
    %vm147 = vweird.f32 %v141
    %vm148 = vmor %vm146, %vm147
    %v149 = vsel %vm148, %v141, %v145
    %v150 = vand.u32 2147483647, %v125
    %vm151 = vcmp.eq.f32.partialorder %v150, 8.507059e+37
    %v152 = vand.u32 %v125, 2147483648
    %v153 = vor.u32 1.1754944e-38, %v152
    %v154 = vsel %vm151, %v153, %v149
    %v155 = vmul.f32 1.0, %v154
    %v156 = vmul.f32 %v113, %v140
    %v157 = vmul.f32 %v116, %v155
    %vm158 = vcmask 130048
    %v159 = vsel %vm158, %v156, 0.0
    %160 = vadd.xlane.f32.xlu0 %v159
    %v161 = vpop.xlane.xlu0 %160
    %v162 = vsel %vm158, %v157, 0.0
    %163 = vadd.xlane.f32.xlu0 %v162
    %v164 = vpop.xlane.xlu0 %163
    %v165 = vrcp.pop 16.0
    %v166 = vmul.f32 16.0, %v165
    %v167 = vsub.f32 1.0, %v166
    %v168 = vmul.f32 %v165, %v167
    %v169 = vadd.f32 %v165, %v168
    %vm170 = vweird.f32 %v165
    %v171 = vsel %vm170, %v165, %v169
    %v172 = vmul.f32 %v161, %v171
    %v173 = vmul.f32 %v164, %v171
    %v174 = vsub.f32 %v156, %v172
    %v175 = vsub.f32 %v157, %v173
    %v176 = vmul.f32 %v174, %v174
    %v177 = vmul.f32 %v175, %v175
    %v178 = vsel %vm158, %v176, 0.0
    %179 = vadd.xlane.f32.xlu0 %v178
    %v180 = vpop.xlane.xlu0 %179
    %v181 = vsel %vm158, %v177, 0.0
    %182 = vadd.xlane.f32.xlu0 %v181
    %v183 = vpop.xlane.xlu0 %182
    %v184 = vmul.f32 %v180, %v171
    %v185 = vmul.f32 %v183, %v171
    %v186 = vadd.f32 %v184, 1e-05
    %v187 = vadd.f32 %v185, 1e-05
    %v188 = vrsqrt.pop %v186
    %v189 = vmul.f32 %v188, %v186
    %v190 = vmul.f32 %v189, %v188
    %v191 = vmul.f32 0.5, %v190
    %v192 = vsub.f32 1.5, %v191
    %v193 = vmul.f32 %v188, %v192
    %vm194 = vweird.f32 %v186
    %vm195 = vweird.f32 %v188
    %vm196 = vmor %vm194, %vm195
    %v197 = vsel %vm196, %v188, %v193
    %v198 = vrsqrt.pop %v187
    %v199 = vmul.f32 %v198, %v187
    %v200 = vmul.f32 %v199, %v198
    %v201 = vmul.f32 0.5, %v200
    %v202 = vsub.f32 1.5, %v201
    %v203 = vmul.f32 %v198, %v202
    %vm204 = vweird.f32 %v187
    %vm205 = vweird.f32 %v198
    %vm206 = vmor %vm204, %vm205
    %v207 = vsel %vm206, %v198, %v203
    %v208 = vmul.f32 %v174, %v197
    %v209 = vmul.f32 %v175, %v207
    %v210 = vld [vmem:[%s3] sm:$0xff]
    %v211 = vld [vmem:[%s3 + $0x8] sm:$0xff]
    %v212 = vld [vmem:[%s4] sm:$0x1]
    %v214 = vperm.slane %v212, 0
    %v217 = vsel %vm158, %v208, 0
    %v220 = vsel %vm158, %v209, 0
    %222 = vmatpush.msra.mxu0 0.0
    %223 = vmatpush.msra.mxu0 0.0
    %224 = vmatpush.msra.mxu0 0.0
    %225 = vmatpush.msra.mxu0 0.0
    %226 = vmatpush.msra.mxu0 0.0
    %227 = vmatpush.msra.mxu0 0.0
    %228 = vmatpush.msra.mxu0 0.0
    %229 = vmatpush.msra.mxu0 0.0
    %230 = vmatpush.msra.mxu0 0.0
    %231 = vmatpush.msra.mxu0 0.0
    %232 = vmatpush.msra.mxu0 0.0
    %233 = vmatpush.msra.mxu0 0.0
    %234 = vmatpush.msra.mxu0 0.0
    %235 = vmatpush.msra.mxu0 0.0
    %236 = vmatpush.msra.mxu0 %v211
    %237 = vmatpush.msra.mxu0 %v210
    %238 = vmatmul.f32.gmra.mxu0 %v217
    %v239 = vpop.f32.mrf.mxu0
    %v240 = vadd.f32 %v214, %v239
    %241 = vmatmul.f32.gmra.mxu0 %v220
    %v242 = vpop.f32.mrf.mxu0
    %v243 = vadd.f32 %v214, %v242
    %244 = vdwg.mxu0
    %v245 = vmul.f32 %v240, 0.5
    %v246 = vmul.f32 %v243, 0.5
    %v247 = vmul.f32 %v240, 0.70710677
    %v248 = vmul.f32 %v243, 0.70710677
    %v249 = vmul.f32 %v247, %v247
    %v250 = vmin.f32 16.0, %v249
    %v251 = vmul.f32 %v250, 2.1237322e-06
    %v252 = vadd.f32 %v251, 0.00028619796
    %v253 = vmul.f32 %v250, %v252
    %v254 = vadd.f32 %v253, 0.0036580483
    %v255 = vmul.f32 %v250, %v254
    %v256 = vadd.f32 %v255, 0.05243302
    %v257 = vmul.f32 %v250, %v256
    %v258 = vadd.f32 %v257, 0.18741608
    %v259 = vmul.f32 %v250, %v258
    %v260 = vadd.f32 %v259, 1.1283791
    %v261 = vmul.f32 %v247, %v260
    %v262 = vmul.f32 %v250, 3.8918573e-05
    %v263 = vadd.f32 %v262, 0.001143296
    %v264 = vmul.f32 %v250, %v263
    %v265 = vadd.f32 %v264, 0.014752088
    %v266 = vmul.f32 %v250, %v265
    %v267 = vadd.f32 %v266, 0.112945676
    %v268 = vmul.f32 %v250, %v267
    %v269 = vadd.f32 %v268, 0.4994258
    %v270 = vmul.f32 %v250, %v269
    %v271 = vadd.f32 %v270, 1.0
    %v272 = vrcp.pop %v271
    %v273 = vmul.f32 %v271, %v272
    %v274 = vsub.f32 1.0, %v273
    %v275 = vmul.f32 %v272, %v274
    %v276 = vadd.f32 %v272, %v275
    %vm277 = vweird.f32 %v271
    %vm278 = vweird.f32 %v272
    %vm279 = vmor %vm277, %vm278
    %v280 = vsel %vm279, %v272, %v276
    %v281 = vand.u32 2147483647, %v271
    %vm282 = vcmp.eq.f32.partialorder %v281, 8.507059e+37
    %v283 = vand.u32 %v271, 2147483648
    %v284 = vor.u32 1.1754944e-38, %v283
    %v285 = vsel %vm282, %v284, %v280
    %v286 = vmul.f32 %v261, %v285
    %v287 = vmin.f32 %v286, 1.0
    %v288 = vmax.f32 %v287, -1.0
    %v289 = vmul.f32 %v248, %v248
    %v290 = vmin.f32 16.0, %v289
    %v291 = vmul.f32 %v290, 2.1237322e-06
    %v292 = vadd.f32 %v291, 0.00028619796
    %v293 = vmul.f32 %v290, %v292
    %v294 = vadd.f32 %v293, 0.0036580483
    %v295 = vmul.f32 %v290, %v294
    %v296 = vadd.f32 %v295, 0.05243302
    %v297 = vmul.f32 %v290, %v296
    %v298 = vadd.f32 %v297, 0.18741608
    %v299 = vmul.f32 %v290, %v298
    %v300 = vadd.f32 %v299, 1.1283791
    %v301 = vmul.f32 %v248, %v300
    %v302 = vmul.f32 %v290, 3.8918573e-05
    %v303 = vadd.f32 %v302, 0.001143296
    %v304 = vmul.f32 %v290, %v303
    %v305 = vadd.f32 %v304, 0.014752088
    %v306 = vmul.f32 %v290, %v305
    %v307 = vadd.f32 %v306, 0.112945676
    %v308 = vmul.f32 %v290, %v307
    %v309 = vadd.f32 %v308, 0.4994258
    %v310 = vmul.f32 %v290, %v309
    %v311 = vadd.f32 %v310, 1.0
    %v312 = vrcp.pop %v311
    %v313 = vmul.f32 %v311, %v312
    %v314 = vsub.f32 1.0, %v313
    %v315 = vmul.f32 %v312, %v314
    %v316 = vadd.f32 %v312, %v315
    %vm317 = vweird.f32 %v311
    %vm318 = vweird.f32 %v312
    %vm319 = vmor %vm317, %vm318
    %v320 = vsel %vm319, %v312, %v316
    %v321 = vand.u32 2147483647, %v311
    %vm322 = vcmp.eq.f32.partialorder %v321, 8.507059e+37
    %v323 = vand.u32 %v311, 2147483648
    %v324 = vor.u32 1.1754944e-38, %v323
    %v325 = vsel %vm322, %v324, %v320
    %v326 = vmul.f32 %v301, %v325
    %v327 = vmin.f32 %v326, 1.0
    %v328 = vmax.f32 %v327, -1.0
    %v329 = vadd.f32 %v288, 1.0
    %v330 = vadd.f32 %v328, 1.0
    %v331 = vmul.f32 %v245, %v329
    %v332 = vmul.f32 %v246, %v330
    %v333 = vld [vmem:[%s5] sm:$0xff]
    %v334 = vld [vmem:[%s6] sm:$0x1]
    %v336 = vperm.slane %v334, 0
    %vm338 = vcmask 64512
    %v340 = vsel %vm338, %v331, 0
    %v343 = vsel %vm338, %v332, 0
    %345 = vmatpush.msra.mxu0 0.0
    %346 = vmatpush.msra.mxu0 0.0
    %347 = vmatpush.msra.mxu0 0.0
    %348 = vmatpush.msra.mxu0 0.0
    %349 = vmatpush.msra.mxu0 0.0
    %350 = vmatpush.msra.mxu0 0.0
    %351 = vmatpush.msra.mxu0 0.0
    %352 = vmatpush.msra.mxu0 0.0
    %353 = vmatpush.msra.mxu0 0.0
    %354 = vmatpush.msra.mxu0 0.0
    %355 = vmatpush.msra.mxu0 0.0
    %356 = vmatpush.msra.mxu0 0.0
    %357 = vmatpush.msra.mxu0 0.0
    %358 = vmatpush.msra.mxu0 0.0
    %359 = vmatpush.msra.mxu0 0.0
    %360 = vmatpush.msra.mxu0 %v333
    %361 = vmatmul.f32.gmra.mxu0 %v340
    %v362 = vpop.f32.mrf.mxu0
    %v363 = vadd.f32 %v336, %v362
    %364 = vmatmul.f32.gmra.mxu0 %v343
    %v365 = vpop.f32.mrf.mxu0
    %v366 = vadd.f32 %v336, %v365
    %367 = vdwg.mxu0
    %368 = vst.msk [vmem:[#allocation2] sm:$0xff] %vm158, %v363
    %369 = vst.msk [vmem:[#allocation2 + $0x8] sm:$0xff] %vm158, %v366
    // Predicated region
    $region30: #{tpu_custom_call.1} parent=1 // pred_check
      _
    $region31: #{tpu_custom_call.1} parent=1 // pred_check_branch
      %371 = sbr.rel (0) target = $region33
    $region32: #{tpu_custom_call.1} parent=1 // pred_region
      %373 = vsyncadd [#allocation3], 0
      %s374 = sshll.u32 [#allocation2], 4
      %s375 = int_to_ptr.vmem [resolvable:$true] %s374
      %s376 = sshll.u32 %s7, 4
      %s377 = int_to_ptr.hbm [resolvable:$true] %s376
      %382 = dma.vmem_to_hbm [thread:$0]  %s375, 256, %s377, [#allocation3], 128, 128, 8
    $region33: #{tpu_custom_call.1} parent=1 // pred_fallthru
      _
    // Predicated region
    $region34: #{tpu_custom_call.1} parent=1 // pred_check
      _
    $region35: #{tpu_custom_call.1} parent=1 // pred_check_branch
      %384 = sbr.rel (0) target = $region37
    $region36: #{tpu_custom_call.1} parent=1 // pred_region
      %386 = dma.done [#allocation3], 256
    $region37: #{tpu_custom_call.1} parent=1 // pred_fallthru
      _
    %387 = vsyncpa [#allocation3], 1

</llo_original>
